<compile_context>
chip_gen: v7x
topology: tpu7x:2x2x1
jax: 0.10.0
libtpu: 0.0.40
codegen_flags: <defaults>
</compile_context>

<pallas_src>
import functools

import jax
import jax.numpy as jnp
from jax.experimental import pallas as pl
from jax.experimental.pallas import tpu as pltpu

EPS = 1e-7                      # used by the reference (and the jnp tail path)
LANE = 128
MAX_BLOCK_BYTES = 4 * 1024 * 1024   # per input buffer; x2 when double-buffered


def _cdiv(a, b):
    return -(-a // b)


def _entropy_sum_kernel(x_ref, out_ref, acc_ref):
    i = pl.program_id(0)

    @pl.when(i == 0)
    def _():
        acc_ref[...] = jnp.zeros_like(acc_ref)

    x = x_ref[...].astype(jnp.float32)

    # Bernoulli(sigmoid(x)) negative entropy; one exp, one log, one EUP recip.
    a = jnp.abs(x)
    e = jnp.exp(-a)
    d = 1.0 + e
    r = pl.reciprocal(d, approx=True)      # EUP approx
    r = r * (2.0 - d * r)                  # Newton step 1 (VPU)
    r = r * (2.0 - d * r)                  # Newton step 2 -> full f32 accuracy
    # e*r == (1-p) for x>=0; better conditioned than (1-r) for large |x|.
    ent = -(jnp.log(d) + (e * r) * a)

    # (block_rows, 128) -> (8, 128) with pure VPU adds; the XLU reduce and the
    # SMEM scalar write happen once, on the last grid step.
    acc_ref[...] += jnp.sum(ent.reshape(-1, 8, LANE), axis=0)

    @pl.when(i == pl.num_programs(0) - 1)
    def _():
        out_ref[0, 0] = jnp.sum(acc_ref[...])


def _tail_entropy_sum(tail):
    """Reference-exact entropy sum for the small ragged tail (plain jnp)."""
    p = jax.nn.sigmoid(tail.astype(jnp.float32))
    ent = p * jnp.log(p + EPS) + (1.0 - p) * jnp.log(1.0 - p + EPS)
    return jnp.sum(ent)


def style_entropy_loss(logits):
    """Pallas implementation of StyleEntropyLoss.forward (returns f32 scalar)."""
    total = int(logits.size)
    x_flat = jnp.reshape(logits, (-1,))          # free reshape; native dtype

    itemsize = jnp.dtype(logits.dtype).itemsize
    row_quantum = max(8, 32 // itemsize)         # 8 for f32, 16 for bf16, ...
    max_rows = max(row_quantum,
                   (MAX_BLOCK_BYTES // (LANE * itemsize)) // row_quantum * row_quantum)

    full_rows = total // LANE
    if full_rows >= row_quantum:
        # Split the rows into roughly equal blocks <= max_rows so the ragged
        # tail handled by jnp stays small.
        n_target = _cdiv(full_rows, max_rows)
        block_rows = max(row_quantum,
                         (_cdiv(full_rows, n_target) // row_quantum) * row_quantum)
        block_rows = min(block_rows, max_rows)
        n_blocks = full_rows // block_rows
    else:
        block_rows = 0
        n_blocks = 0

    prefix_elems = n_blocks * block_rows * LANE

    if prefix_elems > 0:
        if prefix_elems == total:
            x2d = jnp.reshape(x_flat, (n_blocks * block_rows, LANE))  # free
        else:
            # Only copies the prefix (no padded writeback like jnp.pad did).
            x2d = jnp.reshape(jax.lax.slice(x_flat, (0,), (prefix_elems,)),
                              (n_blocks * block_rows, LANE))

        partial = pl.pallas_call(
            _entropy_sum_kernel,
            out_shape=jax.ShapeDtypeStruct((1, 1), jnp.float32),
            grid_spec=pltpu.PrefetchScalarGridSpec(
                num_scalar_prefetch=0,
                grid=(n_blocks,),
                in_specs=[pl.BlockSpec((block_rows, LANE), lambda i: (i, 0))],
                out_specs=pl.BlockSpec((1, 1), lambda i: (0, 0),
                                       memory_space=pltpu.SMEM),
                scratch_shapes=[pltpu.VMEM((8, LANE), jnp.float32)],
            ),
            compiler_params=pltpu.CompilerParams(
                dimension_semantics=("arbitrary",),
            ),
            cost_estimate=pl.CostEstimate(
                flops=12 * prefix_elems,
                transcendentals=3 * prefix_elems,
                bytes_accessed=int(prefix_elems * itemsize) + 4,
            ),
        )(x2d)
        prefix_sum = partial[0, 0]
    else:
        prefix_sum = jnp.float32(0.0)

    tail_elems = total - prefix_elems
    if tail_elems > 0:
        tail = jax.lax.slice(x_flat, (prefix_elems,), (total,))
        tail_sum = _tail_entropy_sum(tail)
    else:
        tail_sum = jnp.float32(0.0)

    return ((prefix_sum + tail_sum) / jnp.float32(total)).astype(jnp.float32)


def _reference(logits):
    p = jax.nn.sigmoid(logits.astype(jnp.float32))
    ent = p * jnp.log(p + EPS) + (1.0 - p) * jnp.log(1.0 - p + EPS)
    return jnp.mean(jnp.mean(ent, axis=-1))


if __name__ == "__main__":
    key = jax.random.PRNGKey(0)

    # NCHW logits, as a PyTorch caller would pass them (lane-aligned case,
    # fully handled by the Pallas kernel).
    logits = jax.random.normal(key, (2, 4, 16, 16), dtype=jnp.float32) * 2.0
    loss = jax.block_until_ready(style_entropy_loss(logits))
    ref = jax.block_until_ready(_reference(logits))
    assert jnp.allclose(loss, ref, rtol=1e-5, atol=1e-6), (loss, ref)

    # Non-lane-aligned tiny shape: exercised entirely by the jnp tail path.
    logits2 = jax.random.normal(jax.random.PRNGKey(1), (2, 3, 7, 5),
                                dtype=jnp.float32) * 3.0
    loss2 = jax.block_until_ready(style_entropy_loss(logits2))
    ref2 = jax.block_until_ready(_reference(logits2))
    assert jnp.allclose(loss2, ref2, rtol=1e-5, atol=1e-6), (loss2, ref2)

    # Awkward size: kernel processes the block-aligned prefix, jnp the tail.
    logits3 = jax.random.normal(jax.random.PRNGKey(2), (3, 5, 33, 17),
                                dtype=jnp.float32) * 2.5
    loss3 = jax.block_until_ready(style_entropy_loss(logits3))
    ref3 = jax.block_until_ready(_reference(logits3))
    assert jnp.allclose(loss3, ref3, rtol=1e-5, atol=1e-6), (loss3, ref3)

    # bf16 input: exercises the in-kernel cast and the 16-row sublane quantum.
    logits4 = (jax.random.normal(jax.random.PRNGKey(3), (2, 4, 16, 16),
                                 dtype=jnp.float32) * 2.0).astype(jnp.bfloat16)
    loss4 = jax.block_until_ready(style_entropy_loss(logits4))
    ref4 = jax.block_until_ready(_reference(logits4))
    assert jnp.allclose(loss4, ref4, rtol=1e-5, atol=1e-6), (loss4, ref4)

    print("KERNEL_OK")
</pallas_src>

<mosaic_0001>
module attributes {stable_mosaic.version = 11 : i64} {
  func.func @_entropy_sum_kernel(%arg0: i32, %arg1: memref<16x128xf32, #tpu.memory_space<vmem>>, %arg2: memref<1x1xf32, #tpu.memory_space<smem>>, %arg3: memref<8x128xf32, #tpu.memory_space<vmem>>) attributes {dimension_semantics = [#tpu.dimension_semantics<arbitrary>], iteration_bounds = array<i64: 1>, scalar_prefetch = 0 : i64, scratch_operands = 1 : i64, tpu.core_type = #tpu.core_type<tc>, window_params = [{transform_indices = @transform_0, window_bounds = array<i64: 16, 128>}, {transform_indices = @transform_1, window_bounds = array<i64: 1, 1>}]} {
    %c0_i32 = arith.constant 0 : i32
    %0 = arith.cmpi eq, %arg0, %c0_i32 : i32
    %1 = arith.extui %0 : i1 to i32
    %c0_i32_0 = arith.constant 0 : i32
    %2 = arith.cmpi ne, %1, %c0_i32_0 : i32
    scf.if %2 {
      %cst_13 = arith.constant 0.000000e+00 : f32
      %33 = vector.broadcast %cst_13 : f32 to vector<8x128xf32>
      %c0_14 = arith.constant 0 : index
      %c0_15 = arith.constant 0 : index
      %34 = vector.load %arg3[%c0_14, %c0_15] : memref<8x128xf32, #tpu.memory_space<vmem>>, vector<8x128xf32>
      tpu.vector_store %arg3[%c0_14, %c0_15], %33 {strides = array<i32>} : memref<8x128xf32, #tpu.memory_space<vmem>>, vector<8x128xf32>,
    } else {
    }
    %c0 = arith.constant 0 : index
    %c0_1 = arith.constant 0 : index
    %3 = vector.load %arg1[%c0, %c0_1] : memref<16x128xf32, #tpu.memory_space<vmem>>, vector<16x128xf32>
    %4 = math.absf %3 : vector<16x128xf32>
    %cst = arith.constant 0.000000e+00 : f32
    %5 = vector.broadcast %cst : f32 to vector<16x128xf32>
    %6 = arith.subf %5, %4 : vector<16x128xf32>
    %7 = math.exp %6 : vector<16x128xf32>
    %cst_2 = arith.constant 1.000000e+00 : f32
    %8 = vector.broadcast %cst_2 : f32 to vector<16x128xf32>
    %9 = arith.addf %8, %7 : vector<16x128xf32>
    %10 = tpu.reciprocal %9 {approx = true} : vector<16x128xf32> -> vector<16x128xf32>
    %11 = arith.mulf %9, %10 : vector<16x128xf32>
    %cst_3 = arith.constant 2.000000e+00 : f32
    %12 = vector.broadcast %cst_3 : f32 to vector<16x128xf32>
    %13 = arith.subf %12, %11 : vector<16x128xf32>
    %14 = arith.mulf %10, %13 : vector<16x128xf32>
    %15 = arith.mulf %9, %14 : vector<16x128xf32>
    %cst_4 = arith.constant 2.000000e+00 : f32
    %16 = vector.broadcast %cst_4 : f32 to vector<16x128xf32>
    %17 = arith.subf %16, %15 : vector<16x128xf32>
    %18 = arith.mulf %14, %17 : vector<16x128xf32>
    %19 = math.log %9 : vector<16x128xf32>
    %20 = arith.mulf %7, %18 : vector<16x128xf32>
    %21 = arith.mulf %20, %4 : vector<16x128xf32>
    %22 = arith.addf %19, %21 : vector<16x128xf32>
    %cst_5 = arith.constant 0.000000e+00 : f32
    %23 = vector.broadcast %cst_5 : f32 to vector<16x128xf32>
    %24 = arith.subf %23, %22 : vector<16x128xf32>
    %c0_6 = arith.constant 0 : index
    %c0_7 = arith.constant 0 : index
    %25 = vector.load %arg3[%c0_6, %c0_7] : memref<8x128xf32, #tpu.memory_space<vmem>>, vector<8x128xf32>
    %26 = vector.shape_cast %24 : vector<16x128xf32> to vector<2x8x128xf32>
    %cst_8 = arith.constant dense<0.000000e+00> : vector<8x128xf32>
    %27 = vector.multi_reduction <add>, %26, %cst_8 [0] : vector<2x8x128xf32> to vector<8x128xf32>
    %28 = arith.addf %25, %27 : vector<8x128xf32>
    %c0_9 = arith.constant 0 : index
    %c0_10 = arith.constant 0 : index
    %29 = vector.load %arg3[%c0_9, %c0_10] : memref<8x128xf32, #tpu.memory_space<vmem>>, vector<8x128xf32>
    tpu.vector_store %arg3[%c0_9, %c0_10], %28 {strides = array<i32>} : memref<8x128xf32, #tpu.memory_space<vmem>>, vector<8x128xf32>,
    %c0_i32_11 = arith.constant 0 : i32
    %30 = arith.cmpi eq, %arg0, %c0_i32_11 : i32
    %31 = arith.extui %30 : i1 to i32
    %c0_i32_12 = arith.constant 0 : i32
    %32 = arith.cmpi ne, %31, %c0_i32_12 : i32
    scf.if %32 {
      %c0_13 = arith.constant 0 : index
      %c0_14 = arith.constant 0 : index
      %33 = vector.load %arg3[%c0_13, %c0_14] : memref<8x128xf32, #tpu.memory_space<vmem>>, vector<8x128xf32>
      %34 = vector.shape_cast %33 : vector<8x128xf32> to vector<1x8x128xf32>
      %cst_15 = arith.constant dense<0.000000e+00> : vector<1xf32>
      %35 = vector.multi_reduction <add>, %34, %cst_15 [1, 2] : vector<1x8x128xf32> to vector<1xf32>
      %36 = vector.shape_cast %35 : vector<1xf32> to vector<1x1x1xf32>
      %37 = vector.extract %36[0, 0, 0] : f32 from vector<1x1x1xf32>
      %c0_16 = arith.constant 0 : index
      %c0_17 = arith.constant 0 : index
      %38 = memref.load %arg2[%c0_16, %c0_17] : memref<1x1xf32, #tpu.memory_space<smem>>
      memref.store %37, %arg2[%c0_16, %c0_17] : memref<1x1xf32, #tpu.memory_space<smem>>
    } else {
    }
    return
  }
  func.func @transform_0(%arg0: i32) -> (i32, i32) {
    %c0_i32 = arith.constant 0 : i32
    %c0_i32_0 = arith.constant 0 : i32
    return %arg0, %c0_i32 : i32, i32
  }
  func.func @transform_1(%arg0: i32) -> (i32, i32) {
    %c0_i32 = arith.constant 0 : i32
    %c0_i32_0 = arith.constant 0 : i32
    %c0_i32_1 = arith.constant 0 : i32
    return %c0_i32, %c0_i32_0 : i32, i32
  }
}

</mosaic_0001>

<llo_original>
// kernel: tpu_custom_call.1
$region0: #{tpu_custom_call.1}
  #allocation0 [shape = 'u32[]', space=smem, size = 0x4, offset = 0x4, fixed_abs, tag = 'smem constant byte address 0x4 - core index']
  #allocation1 [shape = 'u32[144,128]{1,0:T(1,128)}', space=vmem, size = 0x12000, scoped, tag = 'internal scratch']
  #allocation2 [shape = 'f32[8,128]{1,0:T(8,128)}', space=vmem, size = 0x1000, scoped, tag = 'scratch operand']
  %s0 = inlined_call_operand.hbm [shape: f32[16,128], index: 0, kind: input, shape index: {}]
  %s1 = inlined_call_operand.hbm [shape: f32[1,1], index: 1, kind: output, shape index: {}]
  %s2 = sld [smem:[#allocation0]]
  $region26: #{tpu_custom_call.1} parent=0
    _
  %s4 = ssub.s32 1, %s2
  %s5 = scalar_select 0, %s4, %s2
  $region1: #{tpu_custom_call.1} parent=0
    #allocation3 [shape = 'u8[8192]{0}', space=vmem, size = 0x2000, scoped, tag = 'input window, operand 0, single buffered']
    #allocation4 [shape = 's32[1]{0}', space=sflag, size = 0x4, scoped, tag = 'scoped memory for tpu_custom_call.1']
    #allocation5 [shape = 's32[1]{0}', space=sflag, size = 0x4, scoped, tag = 'scoped memory for tpu_custom_call.1']
    #allocation6 [shape = 'u8[512]{0}', space=smem, size = 0x200, scoped, tag = 'output window, operand 0, single buffered']
    %6 = vsyncpa [#allocation4], 0
    %7 = vsyncpa [#allocation5], 0
    // Predicated region
    $region2: #{tpu_custom_call.1} parent=1 // pred_check
      _
    $region3: #{tpu_custom_call.1} parent=1 // pred_check_branch
      %9 = sbr.rel (0) target = $region5
    $region4: #{tpu_custom_call.1} parent=1 // pred_region
      %s11 = ssub.s32 256, 256
      %12 = vsyncadd [#allocation4], %s11
      %s13 = sshll.u32 [#allocation3], 4
      %s14 = int_to_ptr.vmem [resolvable:$true] %s13
      %19 = dma.hbm_to_vmem [thread:$0]  %s0, 256, %s14, [#allocation4], 128, 128, 8
    $region5: #{tpu_custom_call.1} parent=1 // pred_fallthru
      _
    // Predicated region
    $region6: #{tpu_custom_call.1} parent=1 // pred_check
      _
    $region7: #{tpu_custom_call.1} parent=1 // pred_check_branch
      %21 = sbr.rel (0) target = $region9
    $region8: #{tpu_custom_call.1} parent=1 // pred_region
      %22 = dma.done [#allocation4], 256
    $region9: #{tpu_custom_call.1} parent=1 // pred_fallthru
      _
    %p23 = scmp.eq.s32.totalorder 0, 0
    // Predicated region
    $region10: #{tpu_custom_call.1} parent=1 // pred_check
      %p24 = pneg %p23
    $region11: #{tpu_custom_call.1} parent=1 // pred_check_branch
      %26 = sbr.rel (%p24) target = $region13
    $region12: #{tpu_custom_call.1} parent=1 // pred_region
      %27 = vst [vmem:[#allocation2] sm:$0xff] 0.0
    $region13: #{tpu_custom_call.1} parent=1 // pred_fallthru
      _
    %v28 = vld [vmem:[#allocation3] sm:$0xff]
    %v29 = vld [vmem:[#allocation3 + $0x8] sm:$0xff]
    %v30 = vand.u32 2147483647, %v28
    %v31 = vand.u32 2147483647, %v29
    %v32 = vsub.f32 0.0, %v30
    %v33 = vsub.f32 0.0, %v31
    %v34 = vmul.f32 %v32, 1.442695
    %v35 = vpow.pop %v34
    %v36 = vmul.f32 %v33, 1.442695
    %v37 = vpow.pop %v36
    %v38 = vadd.f32 %v35, 1.0
    %v39 = vadd.f32 %v37, 1.0
    %v40 = vrcp.pop %v38
    %v41 = vrcp.pop %v39
    %v42 = vmul.f32 %v38, %v40
    %v43 = vmul.f32 %v39, %v41
    %v44 = vsub.f32 2.0, %v42
    %v45 = vsub.f32 2.0, %v43
    %v46 = vmul.f32 %v40, %v44
    %v47 = vmul.f32 %v41, %v45
    %v48 = vmul.f32 %v38, %v46
    %v49 = vmul.f32 %v39, %v47
    %v50 = vsub.f32 2.0, %v48
    %v51 = vsub.f32 2.0, %v49
    %v52 = vmul.f32 %v46, %v50
    %v53 = vmul.f32 %v47, %v51
    %v54 = vlog2.pop %v38
    %v55 = vmul.f32 %v54, 0.6931472
    %v56 = vlog2.pop %v39
    %v57 = vmul.f32 %v56, 0.6931472
    %v58 = vmul.f32 %v35, %v52
    %v59 = vmul.f32 %v37, %v53
    %v60 = vmul.f32 %v58, %v30
    %v61 = vmul.f32 %v59, %v31
    %v62 = vadd.f32 %v55, %v60
    %v63 = vadd.f32 %v57, %v61
    %v64 = vsub.f32 0.0, %v62
    %v65 = vsub.f32 0.0, %v63
    %v66 = vld [vmem:[#allocation2] sm:$0xff]
    %v67 = vadd.f32 %v64, %v65
    %v68 = vadd.f32 %v66, %v67
    %69 = vst [vmem:[#allocation2] sm:$0xff] %v68
    // Predicated region
    $region14: #{tpu_custom_call.1} parent=1 // pred_check
      %p70 = pneg %p23
    $region15: #{tpu_custom_call.1} parent=1 // pred_check_branch
      %72 = sbr.rel (%p70) target = $region17
    $region16: #{tpu_custom_call.1} parent=1 // pred_region
      %v73 = vld [vmem:[#allocation2] sm:$0xff]
      %74 = vadd.xlane.f32.xlu0 %v73
      %v75 = vpop.xlane.xlu0 %74
      %v76 = vrot.slane %v75, 4
      %v77 = vadd.f32 %v75, %v76
      %v78 = vrot.slane %v77, 2
      %v79 = vadd.f32 %v77, %v78
      %v80 = vrot.slane %v79, 1
      %v81 = vadd.f32 %v79, %v80
      %s82 = vtos %v81
      %s83 = scalar_lea.smem [#allocation6], 0
      %84 = sst [smem:[%s83]] %s82
    $region17: #{tpu_custom_call.1} parent=1 // pred_fallthru
      _
    // Predicated region
    $region18: #{tpu_custom_call.1} parent=1 // pred_check
      _
    $region19: #{tpu_custom_call.1} parent=1 // pred_check_branch
      %86 = sbr.rel (0) target = $region21
    $region20: #{tpu_custom_call.1} parent=1 // pred_region
      %s88 = ssub.s32 16, 16
      %89 = vsyncadd [#allocation5], %s88
      %92 = dma.smem_to_hbm [#allocation6], 16, %s1, [#allocation5]
    $region21: #{tpu_custom_call.1} parent=1 // pred_fallthru
      _
    // Predicated region
    $region22: #{tpu_custom_call.1} parent=1 // pred_check
      _
    $region23: #{tpu_custom_call.1} parent=1 // pred_check_branch
      %94 = sbr.rel (0) target = $region25
    $region24: #{tpu_custom_call.1} parent=1 // pred_region
      %95 = dma.done [#allocation5], 16
    $region25: #{tpu_custom_call.1} parent=1 // pred_fallthru
      _
    %96 = sfence
    %97 = vsyncpa [#allocation4], 1
    %98 = vsyncpa [#allocation5], 1

</llo_original>
